<compile_context>
chip_gen: v5e
topology: v5e:2x2
jax: 0.10.0
libtpu: 0.0.40
codegen_flags: <defaults>
</compile_context>

<pallas_src>
import functools

import jax
import jax.numpy as jnp
import numpy as np
from jax.experimental import pallas as pl
from jax.experimental.pallas import tpu as pltpu

_SUBLANE = 8


def _round_up(x: int, m: int) -> int:
    return (x + m - 1) // m * m


def _tpu_vmem_capacity_bytes() -> int:
    """VMEM capacity of the attached TPU; conservative (v7x) fallback."""
    try:
        return int(pltpu.get_tpu_info().vmem_capacity_bytes)
    except Exception:  # not a TPU / API unavailable -> assume smallest (v7x, 64 MiB)
        return 64 * 1024 * 1024


@functools.lru_cache(maxsize=None)
def _cosine_dft_split(h: int):
    """Device-resident bf16x2 split of C[n,k] = cos(2*pi*n*k/h).

    Built once per H: n*k is reduced mod h in exact integer arithmetic so the
    matrix stays accurate for large H; the f32 matrix is split into
    c_hi = bf16(C), c_lo = bf16(C - c_hi) and cached on device, so repeated
    calls pay no host->device transfer.
    """
    n = np.arange(h, dtype=np.int64)
    nk_mod = np.mod(np.outer(n, n), h).astype(np.float64)
    c32_np = np.cos(2.0 * np.pi * nk_mod / h).astype(np.float32)
    c32 = jnp.asarray(c32_np)                      # one-time transfer per H
    c_hi = c32.astype(jnp.bfloat16)
    c_lo = (c32 - c_hi.astype(jnp.float32)).astype(jnp.bfloat16)
    return jax.block_until_ready((c_hi, c_lo))


def _fft_real_kernel(x_ref, c_hi_ref, c_lo_ref, o_ref):
    """One row tile: 3 bf16 MXU passes emulating the f32 x @ C matmul."""
    x = x_ref[...]                                  # (TM, H) f32
    x_hi = x.astype(jnp.bfloat16)
    x_lo = (x - x_hi.astype(jnp.float32)).astype(jnp.bfloat16)
    c_hi = c_hi_ref[...]                            # (H, H) bf16, VMEM-resident
    c_lo = c_lo_ref[...]
    acc = jnp.dot(x_hi, c_hi, preferred_element_type=jnp.float32)
    acc = acc + jnp.dot(x_lo, c_hi, preferred_element_type=jnp.float32)
    acc = acc + jnp.dot(x_hi, c_lo, preferred_element_type=jnp.float32)
    o_ref[...] = acc.astype(o_ref.dtype)


def _resident_spec(shape):
    """Constant-index, single-buffered BlockSpec for the resident DFT matrix."""
    try:
        return pl.BlockSpec(shape, lambda i: (0, 0), pipeline_mode=pl.Buffered(1))
    except TypeError:
        # Older BlockSpec signature without pipeline_mode: fall back to the
        # (double-buffered) constant-index spec; still DMA'd only once.
        return pl.BlockSpec(shape, lambda i: (0, 0))


def fnet_block_text(x, *, tm: int | None = None):
    """Pallas implementation of FNetBlockText.forward (real part of FFT, last axis)."""
    orig_shape = x.shape
    H = int(orig_shape[-1])
    M = int(np.prod(orig_shape[:-1])) if len(orig_shape) > 1 else 1

    vmem_cap = _tpu_vmem_capacity_bytes()
    # Per-generation defaults: big tiles / big scoped VMEM on 128-MiB parts
    # (v5e/v6e), conservative 512 / 48 MiB on v7x (64 MiB VMEM).
    if tm is None:
        tm = 1024 if vmem_cap >= 96 * 1024 * 1024 else 512
    vmem_limit = min((vmem_cap * 3) // 4, 100 * 1024 * 1024)

    # Row tile: multiple of 8 sublanes, no larger than the row count.
    TM = min(_round_up(tm, _SUBLANE), _round_up(M, _SUBLANE))
    # Ensure >= 2 grid steps when M allows it so the "parallel" axis actually
    # gives both v7x TensorCores work instead of leaving one idle.
    if M > _SUBLANE:
        TM = min(TM, _round_up(pl.cdiv(M, 2), _SUBLANE))
    grid_m = pl.cdiv(M, TM)

    x2d = x.reshape(M, H)
    if x2d.dtype != jnp.float32:
        x2d = x2d.astype(jnp.float32)

    c_hi, c_lo = _cosine_dft_split(H)

    out2d = pl.pallas_call(
        _fft_real_kernel,
        out_shape=jax.ShapeDtypeStruct((M, H), jnp.float32),
        grid_spec=pltpu.PrefetchScalarGridSpec(
            num_scalar_prefetch=0,
            grid=(grid_m,),
            in_specs=[
                # x: one row tile per grid step (double-buffered by Pallas);
                # full (unpadded) hidden axis -> no pad/slice HBM round trips.
                pl.BlockSpec((TM, H), lambda i: (i, 0)),
                # C hi/lo: constant index_map -> DMA'd once, single VMEM copy.
                _resident_spec((H, H)),
                _resident_spec((H, H)),
            ],
            out_specs=pl.BlockSpec((TM, H), lambda i: (i, 0)),
        ),
        compiler_params=pltpu.CompilerParams(
            dimension_semantics=("parallel",),   # shard row tiles across TCs
            vmem_limit_bytes=int(vmem_limit),
        ),
        cost_estimate=pl.CostEstimate(
            flops=6 * M * H * H,                 # 3 bf16 MXU passes
            transcendentals=0,
            bytes_accessed=4 * M * H             # x read (f32)
            + 4 * M * H                          # out write (f32)
            + 4 * H * H,                         # c_hi + c_lo (bf16 each)
        ),
    )(x2d, c_hi, c_lo)

    return out2d.reshape(orig_shape)


if __name__ == "__main__":
    key = jax.random.PRNGKey(0)

    # Canonical small shape (batch=2, seq=8, hidden=32) plus two extra shapes
    # exercising ragged H, a masked row edge block, and multiple grid steps.
    test_shapes = [(2, 8, 32), (3, 5, 40), (4, 16, 96)]

    ok = True
    for shp in test_shapes:
        key, sub = jax.random.split(key)
        x = jax.random.normal(sub, shp, dtype=jnp.float32)

        out = jax.block_until_ready(fnet_block_text(x))
        ref = jnp.fft.fft(x, axis=-1).real   # matches torch.fft.fft(x, dim=-1).real
        if not np.allclose(np.asarray(out), np.asarray(ref), atol=1e-3, rtol=1e-3):
            ok = False
            print(f"MISMATCH for shape {shp}: "
                  f"max_abs_err={np.max(np.abs(np.asarray(out) - np.asarray(ref)))}")

    assert ok
    print("KERNEL_OK")
</pallas_src>

<mosaic_0001>
module attributes {stable_mosaic.version = 11 : i64} {
  func.func @_fft_real_kernel(%arg0: i32, %arg1: memref<8x32xf32, #tpu.memory_space<vmem>>, %arg2: memref<32x32xbf16, #tpu.memory_space<vmem>>, %arg3: memref<32x32xbf16, #tpu.memory_space<vmem>>, %arg4: memref<8x32xf32, #tpu.memory_space<vmem>>) attributes {dimension_semantics = [#tpu.dimension_semantics<parallel>], iteration_bounds = array<i64: 2>, scalar_prefetch = 0 : i64, scratch_operands = 0 : i64, tpu.core_type = #tpu.core_type<tc>, window_params = [{transform_indices = @transform_0, window_bounds = array<i64: 8, 32>}, {pipeline_mode = #tpu.pipeline_mode<synchronous>, transform_indices = @transform_1, window_bounds = array<i64: 32, 32>}, {pipeline_mode = #tpu.pipeline_mode<synchronous>, transform_indices = @transform_2, window_bounds = array<i64: 32, 32>}, {transform_indices = @transform_3, window_bounds = array<i64: 8, 32>}]} {
    %c0 = arith.constant 0 : index
    %c0_0 = arith.constant 0 : index
    %0 = vector.load %arg1[%c0, %c0_0] : memref<8x32xf32, #tpu.memory_space<vmem>>, vector<8x32xf32>
    %1 = arith.truncf %0 : vector<8x32xf32> to vector<8x32xbf16>
    %2 = arith.extf %1 : vector<8x32xbf16> to vector<8x32xf32>
    %3 = arith.subf %0, %2 : vector<8x32xf32>
    %4 = arith.truncf %3 : vector<8x32xf32> to vector<8x32xbf16>
    %c0_1 = arith.constant 0 : index
    %c0_2 = arith.constant 0 : index
    %5 = vector.load %arg2[%c0_1, %c0_2] : memref<32x32xbf16, #tpu.memory_space<vmem>>, vector<32x32xbf16>
    %c0_3 = arith.constant 0 : index
    %c0_4 = arith.constant 0 : index
    %6 = vector.load %arg3[%c0_3, %c0_4] : memref<32x32xbf16, #tpu.memory_space<vmem>>, vector<32x32xbf16>
    %cst = arith.constant dense<0.000000e+00> : vector<8x32xf32>
    %7 = tpu.matmul %1, %5, %cst {dimension_numbers = #tpu.dot_dimension_numbers<[1], [0], [0], [1], [0, 0, 1, 1], [], []>} : vector<8x32xbf16>, vector<32x32xbf16>, vector<8x32xf32> -> vector<8x32xf32>
    %cst_5 = arith.constant dense<0.000000e+00> : vector<8x32xf32>
    %8 = tpu.matmul %4, %5, %cst_5 {dimension_numbers = #tpu.dot_dimension_numbers<[1], [0], [0], [1], [0, 0, 1, 1], [], []>} : vector<8x32xbf16>, vector<32x32xbf16>, vector<8x32xf32> -> vector<8x32xf32>
    %9 = arith.addf %7, %8 : vector<8x32xf32>
    %cst_6 = arith.constant dense<0.000000e+00> : vector<8x32xf32>
    %10 = tpu.matmul %1, %6, %cst_6 {dimension_numbers = #tpu.dot_dimension_numbers<[1], [0], [0], [1], [0, 0, 1, 1], [], []>} : vector<8x32xbf16>, vector<32x32xbf16>, vector<8x32xf32> -> vector<8x32xf32>
    %11 = arith.addf %9, %10 : vector<8x32xf32>
    %c0_7 = arith.constant 0 : index
    %c0_8 = arith.constant 0 : index
    %12 = vector.load %arg4[%c0_7, %c0_8] : memref<8x32xf32, #tpu.memory_space<vmem>>, vector<8x32xf32>
    tpu.vector_store %arg4[%c0_7, %c0_8], %11 {strides = array<i32>} : memref<8x32xf32, #tpu.memory_space<vmem>>, vector<8x32xf32>,
    return
  }
  func.func @transform_0(%arg0: i32) -> (i32, i32) {
    %c0_i32 = arith.constant 0 : i32
    %c0_i32_0 = arith.constant 0 : i32
    return %arg0, %c0_i32 : i32, i32
  }
  func.func @transform_1(%arg0: i32) -> (i32, i32) {
    %c0_i32 = arith.constant 0 : i32
    %c0_i32_0 = arith.constant 0 : i32
    %c0_i32_1 = arith.constant 0 : i32
    return %c0_i32, %c0_i32_0 : i32, i32
  }
  func.func @transform_2(%arg0: i32) -> (i32, i32) {
    %c0_i32 = arith.constant 0 : i32
    %c0_i32_0 = arith.constant 0 : i32
    %c0_i32_1 = arith.constant 0 : i32
    return %c0_i32, %c0_i32_0 : i32, i32
  }
  func.func @transform_3(%arg0: i32) -> (i32, i32) {
    %c0_i32 = arith.constant 0 : i32
    %c0_i32_0 = arith.constant 0 : i32
    return %arg0, %c0_i32 : i32, i32
  }
}

</mosaic_0001>

<llo_original>
// kernel: tpu_custom_call.1
$region0: #{tpu_custom_call.1}
  #allocation0 [shape = 'u32[]', space=smem, size = 0x4, offset = 0x4, fixed_abs, tag = 'smem constant byte address 0x4 - core index']
  #allocation1 [shape = 'u32[72,128]{1,0:T(1,128)}', space=vmem, size = 0x9000, scoped, tag = 'internal scratch']
  %s0 = inlined_call_operand.hbm [shape: f32[16,32], index: 0, kind: input, shape index: {}]
  %s1 = inlined_call_operand.hbm [shape: bf16[32,32], index: 1, kind: input, shape index: {}]
  %s2 = inlined_call_operand.hbm [shape: bf16[32,32], index: 2, kind: input, shape index: {}]
  %s3 = inlined_call_operand.hbm [shape: f32[16,32], index: 3, kind: output, shape index: {}]
  %s4 = sld [smem:[#allocation0]]
  $region57: #{tpu_custom_call.1} parent=0
    _
  %s6 = ssub.s32 1, %s4
  %s7 = scalar_select 0, %s6, %s4
  $region1: #{tpu_custom_call.1} parent=0
    #allocation2 [shape = 'u8[8192]{0}', space=vmem, size = 0x2000, scoped, tag = 'input window, operand 0']
    #allocation3 [shape = 's32[2]{0}', space=sflag, size = 0x8, scoped, tag = 'scoped memory for tpu_custom_call.1']
    #allocation4 [shape = 's32[2]{0}', space=sflag, size = 0x8, scoped, tag = 'scoped memory for tpu_custom_call.1']
    #allocation5 [shape = 'u8[8192]{0}', space=vmem, size = 0x2000, scoped, tag = 'input window, operand 1, single buffered']
    #allocation6 [shape = 's32[1]{0}', space=sflag, size = 0x4, scoped, tag = 'scoped memory for tpu_custom_call.1']
    #allocation7 [shape = 'u8[8192]{0}', space=vmem, size = 0x2000, scoped, tag = 'input window, operand 2, single buffered']
    #allocation8 [shape = 'u8[8192]{0}', space=vmem, size = 0x2000, scoped, tag = 'output window, operand 0']
    %8 = vsyncpa [#allocation3], 0
    %s9 = scalar_lea.sflag [#allocation3], 1
    %10 = vsyncpa %s9, 0
    %11 = vsyncpa [#allocation6], 0
    %12 = vsyncpa [#allocation4], 0
    %s13 = scalar_lea.sflag [#allocation4], 1
    %14 = vsyncpa %s13, 0
    loop: start=0, step=1, limit=4
    $region2: #{tpu_custom_call.1} parent=1 // loop_pre_header
      _
    $region3: #{tpu_custom_call.1} parent=1 // loop_header
      %s16 = sphi 0, %s20
      %p17 = scmp.ge.s32.totalorder %s16, 4
      %s26 = sphi 0, %s28
      %s29 = sphi 0, %s26
      %s30 = sphi 0, %s29
      %s46 = sphi 0, %s30
      %s50 = sphi 0, %s50
      %s52 = sphi 0, %s50
      %s53 = sphi 0, %s52
      %s67 = sphi 0, %s53
      %s71 = sphi 0, %s71
      %s73 = sphi 0, %s71
      %s74 = sphi 0, %s73
      %s88 = sphi 0, %s74
      %s94 = sphi 0, %s96
      %s97 = sphi 0, %s94
      %s98 = sphi 0, %s97
      %s114 = sphi 0, %s98
    $region4: #{tpu_custom_call.1} parent=1 // loop_header_branch
      %19 = sbr.rel (%p17) target = $region8
    $region5: #{tpu_custom_call.1} parent=1 // loop_body
      %s21 = ssub.s32 %s16, 1
      %s22 = ssub.s32 %s16, 2
      %s23 = sadd.s32 %s16, 1
      %s24 = ssub.s32 %s16, %s23
      %p25 = scmp.eq.s32.totalorder %s24, 0
      %s27 = sadd.s32 %s26, 1
      %s28 = scalar_select %p25, %s26, %s27
      %p31 = pneg %p25
      %p32 = scmp.eq.s32.totalorder %s16, 1
      %p33 = por %p31, %p32
      %p34 = scmp.ne.s32.totalorder %s26, %s29
      %p35 = scmp.eq.s32.totalorder %s16, 0
      %p36 = por %p34, %p35
      %p37 = scmp.ne.s32.totalorder %s26, %s29
      %p38 = scmp.eq.s32.totalorder %s21, 1
      %p39 = por %p37, %p38
      %p40 = scmp.ne.s32.totalorder %s29, %s30
      %p41 = scmp.eq.s32.totalorder %s21, 0
      %p42 = por %p40, %p41
      %p43 = scmp.ne.s32.totalorder %s29, %s30
      %p44 = scmp.eq.s32.totalorder %s22, 1
      %p45 = por %p43, %p44
      %p47 = scmp.ne.s32.totalorder %s30, %s46
      %p48 = scmp.eq.s32.totalorder %s22, 0
      %p49 = por %p47, %p48
      %s51 = sadd.s32 %s50, 1
      %p54 = scmp.eq.s32.totalorder %s16, 1
      %p55 = scmp.ne.s32.totalorder %s50, %s52
      %p56 = scmp.eq.s32.totalorder %s16, 0
      %p57 = por %p55, %p56
      %p58 = scmp.ne.s32.totalorder %s50, %s52
      %p59 = scmp.eq.s32.totalorder %s21, 1
      %p60 = por %p58, %p59
      %p61 = scmp.ne.s32.totalorder %s52, %s53
      %p62 = scmp.eq.s32.totalorder %s21, 0
      %p63 = por %p61, %p62
      %p64 = scmp.ne.s32.totalorder %s52, %s53
      %p65 = scmp.eq.s32.totalorder %s22, 1
      %p66 = por %p64, %p65
      %p68 = scmp.ne.s32.totalorder %s53, %s67
      %p69 = scmp.eq.s32.totalorder %s22, 0
      %p70 = por %p68, %p69
      %s72 = sadd.s32 %s71, 1
      %p75 = scmp.eq.s32.totalorder %s16, 1
      %p76 = scmp.ne.s32.totalorder %s71, %s73
      %p77 = scmp.eq.s32.totalorder %s16, 0
      %p78 = por %p76, %p77
      %p79 = scmp.ne.s32.totalorder %s71, %s73
      %p80 = scmp.eq.s32.totalorder %s21, 1
      %p81 = por %p79, %p80
      %p82 = scmp.ne.s32.totalorder %s73, %s74
      %p83 = scmp.eq.s32.totalorder %s21, 0
      %p84 = por %p82, %p83
      %p85 = scmp.ne.s32.totalorder %s73, %s74
      %p86 = scmp.eq.s32.totalorder %s22, 1
      %p87 = por %p85, %p86
      %p89 = scmp.ne.s32.totalorder %s74, %s88
      %p90 = scmp.eq.s32.totalorder %s22, 0
      %p91 = por %p89, %p90
      %s92 = ssub.s32 %s16, %s23
      %p93 = scmp.eq.s32.totalorder %s92, 0
      %s95 = sadd.s32 %s94, 1
      %s96 = scalar_select %p93, %s94, %s95
      %p99 = pneg %p93
      %p100 = scmp.eq.s32.totalorder %s16, 1
      %p101 = por %p99, %p100
      %p102 = scmp.ne.s32.totalorder %s94, %s97
      %p103 = scmp.eq.s32.totalorder %s16, 0
      %p104 = por %p102, %p103
      %p105 = scmp.ne.s32.totalorder %s94, %s97
      %p106 = scmp.eq.s32.totalorder %s21, 1
      %p107 = por %p105, %p106
      %p108 = scmp.ne.s32.totalorder %s97, %s98
      %p109 = scmp.eq.s32.totalorder %s21, 0
      %p110 = por %p108, %p109
      %p111 = scmp.ne.s32.totalorder %s97, %s98
      %p112 = scmp.eq.s32.totalorder %s22, 1
      %p113 = por %p111, %p112
      %p115 = scmp.ne.s32.totalorder %s98, %s114
      %p116 = scmp.eq.s32.totalorder %s22, 0
      %p117 = por %p115, %p116
      %p118 = scmp.le.s32.totalorder 1, %s16
      %p119 = scmp.lt.s32.totalorder %s16, 3
      %p120 = pnand %p118, %p119
      %p121 = pneg %p120
      // Predicated region
      $region9: #{tpu_custom_call.1} parent=5 // pred_check
        _
      $region10: #{tpu_custom_call.1} parent=5 // pred_check_branch
        %123 = sbr.rel (%p120) target = $region12
      $region11: #{tpu_custom_call.1} parent=5 // pred_region
        %s124 = ssub.s32 %s16, 1
        // Predicated region
        $region13: #{tpu_custom_call.1} parent=11 // pred_check
          %p125 = pneg %p63
        $region14: #{tpu_custom_call.1} parent=11 // pred_check_branch
          %127 = sbr.rel (%p125) target = $region16
        $region15: #{tpu_custom_call.1} parent=11 // pred_region
          %129 = vsyncadd [#allocation6], 0
          %s130 = sshll.u32 %s1, 4
          %s131 = int_to_ptr.hbm [resolvable:$true] %s130
          %s132 = sshll.u32 [#allocation5], 4
          %s133 = int_to_ptr.vmem [resolvable:$true] %s132
          %138 = dma.hbm_to_vmem [thread:$0]  %s131, 256, %s133, [#allocation6], 64, 64, 4
        $region16: #{tpu_custom_call.1} parent=11 // pred_fallthru
          _
        // Predicated region
        $region17: #{tpu_custom_call.1} parent=11 // pred_check
          %p139 = pneg %p84
        $region18: #{tpu_custom_call.1} parent=11 // pred_check_branch
          %141 = sbr.rel (%p139) target = $region20
        $region19: #{tpu_custom_call.1} parent=11 // pred_region
          %143 = vsyncadd [#allocation6], 0
          %s144 = sshll.u32 %s2, 4
          %s145 = int_to_ptr.hbm [resolvable:$true] %s144
          %s146 = sshll.u32 [#allocation7], 4
          %s147 = int_to_ptr.vmem [resolvable:$true] %s146
          %152 = dma.hbm_to_vmem [thread:$0]  %s145, 256, %s147, [#allocation6], 64, 64, 4
        $region20: #{tpu_custom_call.1} parent=11 // pred_fallthru
          _
      $region12: #{tpu_custom_call.1} parent=5 // pred_fallthru
        _
      %p153 = scmp.lt.s32.totalorder %s16, 2
      // Predicated region
      $region21: #{tpu_custom_call.1} parent=5 // pred_check
        %p154 = pneg %p153
      $region22: #{tpu_custom_call.1} parent=5 // pred_check_branch
        %156 = sbr.rel (%p154) target = $region24
      $region23: #{tpu_custom_call.1} parent=5 // pred_region
        // Predicated region
        $region25: #{tpu_custom_call.1} parent=23 // pred_check
          %p157 = pneg %p36
        $region26: #{tpu_custom_call.1} parent=23 // pred_check_branch
          %159 = sbr.rel (%p157) target = $region28
        $region27: #{tpu_custom_call.1} parent=23 // pred_region
          %s160 = sand.u32 %s26, 1
          %s161 = scalar_lea.sflag [#allocation3], %s160
          %s162 = sand.u32 %s26, 1
          %s163 = smul.addr %s162, 8
          %s164 = scalar_lea.vmem [#allocation2], %s163
          %166 = vsyncadd %s161, 0
          %s167 = smul.addr %s16, 8
          %s168 = scalar_lea.hbm %s0, %s167
          %s170 = sshll.u32 %s168, 4
          %s171 = int_to_ptr.hbm [resolvable:$true] %s170
          %s172 = sshll.u32 %s164, 4
          %s173 = int_to_ptr.vmem [resolvable:$true] %s172
          %175 = dma.hbm_to_vmem [thread:$0]  %s171, 128, %s173, %s161
        $region28: #{tpu_custom_call.1} parent=23 // pred_fallthru
          _
      $region24: #{tpu_custom_call.1} parent=5 // pred_fallthru
        _
      %p176 = scmp.le.s32.totalorder 1, %s16
      %p177 = scmp.lt.s32.totalorder %s16, 3
      %p178 = pnand %p176, %p177
      %p179 = pneg %p178
      // Predicated region
      $region29: #{tpu_custom_call.1} parent=5 // pred_check
        _
      $region30: #{tpu_custom_call.1} parent=5 // pred_check_branch
        %181 = sbr.rel (%p178) target = $region32
      $region31: #{tpu_custom_call.1} parent=5 // pred_region
        %s182 = ssub.s32 %s16, 1
        %s183 = sand.u32 %s29, 1
        %s184 = scalar_lea.sflag [#allocation3], %s183
        %s185 = sand.u32 %s29, 1
        %s186 = smul.addr %s185, 8
        %s187 = scalar_lea.vmem [#allocation2], %s186
        // Predicated region
        $region33: #{tpu_custom_call.1} parent=31 // pred_check
          %p188 = pneg %p42
        $region34: #{tpu_custom_call.1} parent=31 // pred_check_branch
          %190 = sbr.rel (%p188) target = $region36
        $region35: #{tpu_custom_call.1} parent=31 // pred_region
          %192 = dma.done %s184, 128
        $region36: #{tpu_custom_call.1} parent=31 // pred_fallthru
          _
        // Predicated region
        $region37: #{tpu_custom_call.1} parent=31 // pred_check
          %p193 = pneg %p63
        $region38: #{tpu_custom_call.1} parent=31 // pred_check_branch
          %195 = sbr.rel (%p193) target = $region40
        $region39: #{tpu_custom_call.1} parent=31 // pred_region
          %197 = dma.done [#allocation6], 256
        $region40: #{tpu_custom_call.1} parent=31 // pred_fallthru
          _
        // Predicated region
        $region41: #{tpu_custom_call.1} parent=31 // pred_check
          %p198 = pneg %p84
        $region42: #{tpu_custom_call.1} parent=31 // pred_check_branch
          %200 = sbr.rel (%p198) target = $region44
        $region43: #{tpu_custom_call.1} parent=31 // pred_region
          %202 = dma.done [#allocation6], 256
        $region44: #{tpu_custom_call.1} parent=31 // pred_fallthru
          _
        %s203 = sand.u32 %s29, 1
        %s204 = scalar_lea.sflag [#allocation3], %s203
        %s205 = sand.u32 %s29, 1
        %s206 = smul.addr %s205, 8
        %s207 = scalar_lea.vmem [#allocation2], %s206
        %p208 = pneg %p42
        %p209 = pneg %p39
        %p210 = pneg %p63
        %p211 = pneg %p60
        %p212 = pneg %p84
        %p213 = pneg %p81
        %p214 = pneg %p110
        %p215 = pneg %p107
        %s216 = sand.u32 %s97, 1
        %s217 = scalar_lea.sflag [#allocation4], %s216
        %s218 = sand.u32 %s97, 1
        %s219 = smul.addr %s218, 8
        %s220 = scalar_lea.vmem [#allocation8], %s219
        %v222 = vld [vmem:[%s187] sm:$0xff]
        %v223 = vpack.c.bf16 %v222, %v222
        %v224 = vunpack.c.l.bf16 %v223
        %v225 = vsub.f32 %v222, %v224
        %v226 = vpack.c.bf16 %v225, %v225
        %v227 = vld [vmem:[#allocation5] sm:$0xf]
        %v228 = vld [vmem:[#allocation5 + $0x4] sm:$0xf]
        %v229 = vld [vmem:[#allocation5 + $0x8] sm:$0xf]
        %v230 = vld [vmem:[#allocation5 + $0xc] sm:$0xf]
        %v231 = vld [vmem:[#allocation7] sm:$0xf]
        %v232 = vld [vmem:[#allocation7 + $0x4] sm:$0xf]
        %v233 = vld [vmem:[#allocation7 + $0x8] sm:$0xf]
        %v234 = vld [vmem:[#allocation7 + $0xc] sm:$0xf]
        %v239 = vunpack.c.l.b16 %v227
        %v240 = vunpack.c.l.b16 %v228
        %v241 = vunpack.c.l.b16 %v229
        %v242 = vunpack.c.l.b16 %v230
        %v243 = vpack.c.b16 %v240, %v239
        %v244 = vpack.c.b16 %v242, %v241
        %vm247 = vcmask 261120
        %v249 = vsel %vm247, %v226, 0
        %251 = vmatpush.bf16.msra.mxu0 0
        %252 = vmatpush.bf16.msra.mxu0 0
        %253 = vmatpush.bf16.msra.mxu0 0
        %254 = vmatpush.bf16.msra.mxu0 0
        %255 = vmatpush.bf16.msra.mxu0 0
        %256 = vmatpush.bf16.msra.mxu0 0
        %257 = vmatpush.bf16.msra.mxu0 %v244
        %258 = vmatpush.bf16.msra.mxu0 %v243
        %259 = vmatmul.bf16.gmra.mxu0 %v249
        %v260 = vpop.f32.mrf.mxu0
        %v261 = vadd.f32 0.0, %v260
        %v262 = vpop.f32.mrf.mxu0
        %263 = vdwg.mxu0
        %v265 = vsel %vm247, %v223, 0
        %267 = vmatpush.bf16.msra.mxu0 0
        %268 = vmatpush.bf16.msra.mxu0 0
        %269 = vmatpush.bf16.msra.mxu0 0
        %270 = vmatpush.bf16.msra.mxu0 0
        %271 = vmatpush.bf16.msra.mxu0 0
        %272 = vmatpush.bf16.msra.mxu0 0
        %273 = vmatpush.bf16.msra.mxu0 %v244
        %274 = vmatpush.bf16.msra.mxu0 %v243
        %275 = vmatmul.bf16.gmra.mxu0 %v265
        %v276 = vpop.f32.mrf.mxu0
        %v277 = vadd.f32 %v261, %v276
        %v278 = vpop.f32.mrf.mxu0
        %279 = vdwg.mxu0
        %v284 = vunpack.c.l.b16 %v231
        %v285 = vunpack.c.l.b16 %v232
        %v286 = vunpack.c.l.b16 %v233
        %v287 = vunpack.c.l.b16 %v234
        %v288 = vpack.c.b16 %v285, %v284
        %v289 = vpack.c.b16 %v287, %v286
        %292 = vmatpush.bf16.msra.mxu0 0
        %293 = vmatpush.bf16.msra.mxu0 0
        %294 = vmatpush.bf16.msra.mxu0 0
        %295 = vmatpush.bf16.msra.mxu0 0
        %296 = vmatpush.bf16.msra.mxu0 0
        %297 = vmatpush.bf16.msra.mxu0 0
        %298 = vmatpush.bf16.msra.mxu0 %v289
        %299 = vmatpush.bf16.msra.mxu0 %v288
        %300 = vmatmul.bf16.gmra.mxu0 %v265
        %v301 = vpop.f32.mrf.mxu0
        %v302 = vadd.f32 0.0, %v301
        %v303 = vpop.f32.mrf.mxu0
        %304 = vdwg.mxu0
        %v305 = vadd.f32 %v277, %v302
        %306 = vst.msk [vmem:[%s220] sm:$0xff] %vm247, %v305
        %s307 = sand.u32 %s97, 1
        %s308 = scalar_lea.sflag [#allocation4], %s307
        %s309 = sand.u32 %s97, 1
        %s310 = smul.addr %s309, 8
        %s311 = scalar_lea.vmem [#allocation8], %s310
        // Predicated region
        $region45: #{tpu_custom_call.1} parent=31 // pred_check
          %p312 = pneg %p107
        $region46: #{tpu_custom_call.1} parent=31 // pred_check_branch
          %314 = sbr.rel (%p312) target = $region48
        $region47: #{tpu_custom_call.1} parent=31 // pred_region
          %316 = vsyncadd %s308, 0
          %s317 = smul.addr %s21, 8
          %s318 = scalar_lea.hbm %s3, %s317
          %s320 = sshll.u32 %s311, 4
          %s321 = int_to_ptr.vmem [resolvable:$true] %s320
          %s322 = sshll.u32 %s318, 4
          %s323 = int_to_ptr.hbm [resolvable:$true] %s322
          %325 = dma.vmem_to_hbm [thread:$0]  %s321, 128, %s323, %s308
        $region48: #{tpu_custom_call.1} parent=31 // pred_fallthru
          _
      $region32: #{tpu_custom_call.1} parent=5 // pred_fallthru
        _
      %p326 = scmp.le.s32.totalorder 2, %s16
      // Predicated region
      $region49: #{tpu_custom_call.1} parent=5 // pred_check
        %p327 = pneg %p326
      $region50: #{tpu_custom_call.1} parent=5 // pred_check_branch
        %329 = sbr.rel (%p327) target = $region52
      $region51: #{tpu_custom_call.1} parent=5 // pred_region
        %s330 = ssub.s32 %s16, 2
        // Predicated region
        $region53: #{tpu_custom_call.1} parent=51 // pred_check
          %p331 = pneg %p113
        $region54: #{tpu_custom_call.1} parent=51 // pred_check_branch
          %333 = sbr.rel (%p331) target = $region56
        $region55: #{tpu_custom_call.1} parent=51 // pred_region
          %s334 = sand.u32 %s98, 1
          %s335 = scalar_lea.sflag [#allocation4], %s334
          %s336 = sand.u32 %s98, 1
          %s337 = smul.addr %s336, 8
          %s338 = scalar_lea.vmem [#allocation8], %s337
          %340 = dma.done %s335, 128
        $region56: #{tpu_custom_call.1} parent=51 // pred_fallthru
          _
      $region52: #{tpu_custom_call.1} parent=5 // pred_fallthru
        _
    $region6: #{tpu_custom_call.1} parent=1 // loop_footer
      %s20 = sadd.s32 1, %s16
    $region7: #{tpu_custom_call.1} parent=1 // loop_footer_branch
      %15 = sbr.rel target = $region3
    $region8: #{tpu_custom_call.1} parent=1 // loop_exit
      _
    %341 = vsyncpa [#allocation3], 1
    %s342 = scalar_lea.sflag [#allocation3], 1
    %343 = vsyncpa %s342, 1
    %344 = vsyncpa [#allocation6], 1
    %345 = vsyncpa [#allocation4], 1
    %s346 = scalar_lea.sflag [#allocation4], 1
    %347 = vsyncpa %s346, 1

</llo_original>
